<compile_context>
chip_gen: v6e
topology: v6e:2x2x1
jax: 0.10.0
libtpu: 0.0.40
codegen_flags: <defaults>
</compile_context>

<pallas_src>
import functools
import numpy as np
import jax
import jax.numpy as jnp
from jax.experimental import pallas as pl
from jax.experimental.pallas import tpu as pltpu

# ---------------- config (small, consistent with the module) ----------------
N_RES = 8
SINGLE_DIM = 32
PROJ_DIM = 16
N_TORSIONS = 7                 # len(AA_TORSION_NAMES): omega, phi, psi, chi1..chi4
OUT_DIM = 2 * N_TORSIONS       # 14


# =========================== Pallas kernel ==================================
def _angle_resnet_kernel(s_ref, si_ref, wb_ref, o_ref, *, sd, p, out_dim):
    """Fully fused AngleResNet forward for one row-tile of residues.

    s_ref  : [TM, sd]      single_rep tile (f32)
    si_ref : [TM, sd]      single_rep_initial tile (f32)
    wb_ref : [R, p]        packed bf16 weight/bias slab (row layout below)
    o_ref  : [TM, out_dim] predicted angles (f32)

    Slab rows:  w1[sd] | w2[sd] | w11[p] | w12[p] | w21[p] | w22[p]
              | wang[p] (cols padded to p) | 6 bias rows (b_in,b11,b12,b21,b22,bang)
    """
    r = 0
    w1   = wb_ref[r:r + sd, :]; r += sd
    w2   = wb_ref[r:r + sd, :]; r += sd
    w11  = wb_ref[r:r + p, :];  r += p
    w12  = wb_ref[r:r + p, :];  r += p
    w21  = wb_ref[r:r + p, :];  r += p
    w22  = wb_ref[r:r + p, :];  r += p
    wang = wb_ref[r:r + p, :];  r += p
    biases = wb_ref[r:r + 6, :].astype(jnp.float32)           # [6, p]
    b_in, b11, b12, b21, b22, bang = (biases[i:i + 1, :] for i in range(6))

    def mm(x_f32, w_bf16):
        # bf16 MXU operands (weights pre-cast in the slab), f32 accumulation.
        return jnp.dot(x_f32.astype(jnp.bfloat16), w_bf16,
                       preferred_element_type=jnp.float32)

    # a = single_proj1(single_rep) + single_proj2(single_rep_initial)
    a = mm(s_ref[...], w1) + mm(si_ref[...], w2) + b_in

    # a = a + angle_proj1(a)     (ReLU -> Linear -> ReLU -> Linear)
    h = jnp.maximum(mm(jnp.maximum(a, 0.0), w11) + b11, 0.0)
    a = a + mm(h, w12) + b12

    # a = a + angle_proj2(a)
    h = jnp.maximum(mm(jnp.maximum(a, 0.0), w21) + b21, 0.0)
    a = a + mm(h, w22) + b22

    # to_pred_angles: ReLU -> Linear   (wang cols padded to p; keep first out_dim)
    ang = mm(jnp.maximum(a, 0.0), wang) + bang
    o_ref[...] = ang[:, :out_dim]


# =========================== weight packing ==================================
def pack_params(params):
    """Pack all weights/biases into one bf16 slab (done ONCE, not per call)."""
    p = params['w11'].shape[0]
    pad_c = lambda a: jnp.pad(a, ((0, 0), (0, p - a.shape[1])))
    row = lambda b: b.reshape(1, -1)
    blocks = [
        params['w1'], params['w2'],
        params['w11'], params['w12'], params['w21'], params['w22'],
        pad_c(params['wang']),
        row(params['b1'] + params['b2']),              # folded input bias
        row(params['b11']), row(params['b12']),
        row(params['b21']), row(params['b22']),
        pad_c(row(params['bang'])),
    ]
    slab = jnp.concatenate(blocks, axis=0)             # [150, p]
    slab = jnp.pad(slab, ((0, (-slab.shape[0]) % 16), (0, 0)))   # bf16 sublane pack
    return slab.astype(jnp.bfloat16)


# =========================== wrapper ========================================
def angle_resnet_forward(weight_slab, single_rep, single_rep_initial, *, row_tile=None):
    n, sd = single_rep.shape
    p = weight_slab.shape[1]
    out_dim = OUT_DIM

    # Row tile: big tiles amortize per-step overhead; for large n force >=2
    # grid steps so the "parallel" axis shards across v7x's two TensorCores.
    # VMEM is never a constraint at these widths (<= ~0.6 MiB per input tile).
    if row_tile is None:
        if n <= 1024:
            row_tile = n
        else:
            row_tile = min(4096, pl.cdiv(n, 2))
            row_tile = max(16, (row_tile // 16) * 16)
    grid = (pl.cdiv(n, row_tile),)

    rows = lambda c: pl.BlockSpec((row_tile, c), lambda i: (i, 0))
    whole = pl.BlockSpec(weight_slab.shape, lambda i: (0, 0))

    flops = 2 * n * (2 * sd * p + 4 * p * p + p * out_dim)
    bytes_accessed = 4 * n * (2 * sd + out_dim) + 2 * int(weight_slab.size)

    kernel = functools.partial(_angle_resnet_kernel, sd=sd, p=p, out_dim=out_dim)

    out = pl.pallas_call(
        kernel,
        out_shape=jax.ShapeDtypeStruct((n, out_dim), jnp.float32),
        grid=grid,
        in_specs=[rows(sd), rows(sd), whole],
        out_specs=rows(out_dim),
        compiler_params=pltpu.CompilerParams(
            dimension_semantics=("parallel",)),
        cost_estimate=pl.CostEstimate(flops=flops, transcendentals=0,
                                      bytes_accessed=bytes_accessed),
    )(single_rep, single_rep_initial, weight_slab)
    return out.reshape(n, N_TORSIONS, 2)


# =========================== pure-JAX reference ==============================
def angle_resnet_ref(params, s, s_init):
    a = s @ params['w1'] + params['b1'] + s_init @ params['w2'] + params['b2']
    h = jnp.maximum(jnp.maximum(a, 0.0) @ params['w11'] + params['b11'], 0.0)
    a = a + h @ params['w12'] + params['b12']
    h = jnp.maximum(jnp.maximum(a, 0.0) @ params['w21'] + params['b21'], 0.0)
    a = a + h @ params['w22'] + params['b22']
    ang = jnp.maximum(a, 0.0) @ params['wang'] + params['bang']
    return ang.reshape(-1, N_TORSIONS, 2)


# =========================== deterministic init =============================
def _init_linear(key, fan_in, fan_out):
    k1, k2 = jax.random.split(key)
    lim = 1.0 / np.sqrt(fan_in)
    w = jax.random.uniform(k1, (fan_in, fan_out), jnp.float32, -lim, lim)
    b = jax.random.uniform(k2, (fan_out,), jnp.float32, -lim, lim)
    return w, b


def init_params(key):
    keys = iter(jax.random.split(key, 8))
    p = {}
    p['w1'], p['b1'] = _init_linear(next(keys), SINGLE_DIM, PROJ_DIM)     # single_proj1
    p['w2'], p['b2'] = _init_linear(next(keys), SINGLE_DIM, PROJ_DIM)     # single_proj2
    p['w11'], p['b11'] = _init_linear(next(keys), PROJ_DIM, PROJ_DIM)     # angle_proj1[1]
    p['w12'], p['b12'] = _init_linear(next(keys), PROJ_DIM, PROJ_DIM)     # angle_proj1[3]
    p['w21'], p['b21'] = _init_linear(next(keys), PROJ_DIM, PROJ_DIM)     # angle_proj2[1]
    p['w22'], p['b22'] = _init_linear(next(keys), PROJ_DIM, PROJ_DIM)     # angle_proj2[3]
    p['wang'], p['bang'] = _init_linear(next(keys), PROJ_DIM, 2 * N_TORSIONS)
    return p


# =========================== main ===========================================
if __name__ == "__main__":
    key = jax.random.PRNGKey(0)
    kp, ks1, ks2 = jax.random.split(key, 3)
    params = init_params(kp)
    weight_slab = pack_params(params)      # packed & bf16-cast once

    single_rep = jax.random.normal(ks1, (N_RES, SINGLE_DIM), jnp.float32)
    single_rep_initial = jax.random.normal(ks2, (N_RES, SINGLE_DIM), jnp.float32)

    fwd = jax.jit(functools.partial(angle_resnet_forward, weight_slab))
    pred_angles = fwd(single_rep, single_rep_initial)
    jax.block_until_ready(pred_angles)

    assert pred_angles.shape == (N_RES, N_TORSIONS, 2)

    ref = angle_resnet_ref(params, single_rep, single_rep_initial)
    # bf16 MXU operands with f32 accumulation -> loose tolerance vs f32 reference.
    np.testing.assert_allclose(np.asarray(pred_angles), np.asarray(ref),
                               atol=5e-2, rtol=5e-2)
    print("KERNEL_OK")
</pallas_src>

<mosaic_0001>
module attributes {stable_mosaic.version = 11 : i64} {
  func.func @_angle_resnet_kernel(%arg0: i32, %arg1: memref<8x32xf32, #tpu.memory_space<vmem>>, %arg2: memref<8x32xf32, #tpu.memory_space<vmem>>, %arg3: memref<160x16xbf16, #tpu.memory_space<vmem>>, %arg4: memref<8x14xf32, #tpu.memory_space<vmem>>) attributes {dimension_semantics = [#tpu.dimension_semantics<parallel>], iteration_bounds = array<i64: 1>, scalar_prefetch = 0 : i64, scratch_operands = 0 : i64, tpu.core_type = #tpu.core_type<tc>, window_params = [{transform_indices = @transform_0, window_bounds = array<i64: 8, 32>}, {transform_indices = @transform_1, window_bounds = array<i64: 8, 32>}, {pipeline_mode = #tpu.pipeline_mode<synchronous>, transform_indices = @transform_2, window_bounds = array<i64: 160, 16>}, {transform_indices = @transform_3, window_bounds = array<i64: 8, 14>}]} {
    %c0 = arith.constant 0 : index
    %c0_0 = arith.constant 0 : index
    %0 = vector.load %arg3[%c0, %c0_0] : memref<160x16xbf16, #tpu.memory_space<vmem>>, vector<32x16xbf16>
    %c32 = arith.constant 32 : index
    %c0_1 = arith.constant 0 : index
    %1 = vector.load %arg3[%c32, %c0_1] : memref<160x16xbf16, #tpu.memory_space<vmem>>, vector<32x16xbf16>
    %c64 = arith.constant 64 : index
    %c0_2 = arith.constant 0 : index
    %2 = vector.load %arg3[%c64, %c0_2] : memref<160x16xbf16, #tpu.memory_space<vmem>>, vector<16x16xbf16>
    %c80 = arith.constant 80 : index
    %c0_3 = arith.constant 0 : index
    %3 = vector.load %arg3[%c80, %c0_3] : memref<160x16xbf16, #tpu.memory_space<vmem>>, vector<16x16xbf16>
    %c96 = arith.constant 96 : index
    %c0_4 = arith.constant 0 : index
    %4 = vector.load %arg3[%c96, %c0_4] : memref<160x16xbf16, #tpu.memory_space<vmem>>, vector<16x16xbf16>
    %c112 = arith.constant 112 : index
    %c0_5 = arith.constant 0 : index
    %5 = vector.load %arg3[%c112, %c0_5] : memref<160x16xbf16, #tpu.memory_space<vmem>>, vector<16x16xbf16>
    %c128 = arith.constant 128 : index
    %c0_6 = arith.constant 0 : index
    %6 = vector.load %arg3[%c128, %c0_6] : memref<160x16xbf16, #tpu.memory_space<vmem>>, vector<16x16xbf16>
    %c144 = arith.constant 144 : index
    %c0_7 = arith.constant 0 : index
    %7 = vector.load %arg3[%c144, %c0_7] : memref<160x16xbf16, #tpu.memory_space<vmem>>, vector<6x16xbf16>
    %8 = arith.extf %7 : vector<6x16xbf16> to vector<6x16xf32>
    %9 = vector.extract_strided_slice %8 {offsets = [0, 0], sizes = [1, 16], strides = [1, 1]} : vector<6x16xf32> to vector<1x16xf32>
    %10 = vector.extract_strided_slice %8 {offsets = [1, 0], sizes = [1, 16], strides = [1, 1]} : vector<6x16xf32> to vector<1x16xf32>
    %11 = vector.extract_strided_slice %8 {offsets = [2, 0], sizes = [1, 16], strides = [1, 1]} : vector<6x16xf32> to vector<1x16xf32>
    %12 = vector.extract_strided_slice %8 {offsets = [3, 0], sizes = [1, 16], strides = [1, 1]} : vector<6x16xf32> to vector<1x16xf32>
    %13 = vector.extract_strided_slice %8 {offsets = [4, 0], sizes = [1, 16], strides = [1, 1]} : vector<6x16xf32> to vector<1x16xf32>
    %14 = vector.extract_strided_slice %8 {offsets = [5, 0], sizes = [1, 16], strides = [1, 1]} : vector<6x16xf32> to vector<1x16xf32>
    %c0_8 = arith.constant 0 : index
    %c0_9 = arith.constant 0 : index
    %15 = vector.load %arg1[%c0_8, %c0_9] : memref<8x32xf32, #tpu.memory_space<vmem>>, vector<8x32xf32>
    %16 = arith.truncf %15 : vector<8x32xf32> to vector<8x32xbf16>
    %cst = arith.constant dense<0.000000e+00> : vector<8x16xf32>
    %17 = tpu.matmul %16, %0, %cst {dimension_numbers = #tpu.dot_dimension_numbers<[1], [0], [0], [1], [0, 0, 1, 1], [], []>} : vector<8x32xbf16>, vector<32x16xbf16>, vector<8x16xf32> -> vector<8x16xf32>
    %c0_10 = arith.constant 0 : index
    %c0_11 = arith.constant 0 : index
    %18 = vector.load %arg2[%c0_10, %c0_11] : memref<8x32xf32, #tpu.memory_space<vmem>>, vector<8x32xf32>
    %19 = arith.truncf %18 : vector<8x32xf32> to vector<8x32xbf16>
    %cst_12 = arith.constant dense<0.000000e+00> : vector<8x16xf32>
    %20 = tpu.matmul %19, %1, %cst_12 {dimension_numbers = #tpu.dot_dimension_numbers<[1], [0], [0], [1], [0, 0, 1, 1], [], []>} : vector<8x32xbf16>, vector<32x16xbf16>, vector<8x16xf32> -> vector<8x16xf32>
    %21 = arith.addf %17, %20 : vector<8x16xf32>
    %22 = vector.broadcast %9 : vector<1x16xf32> to vector<8x16xf32>
    %23 = arith.addf %21, %22 : vector<8x16xf32>
    %cst_13 = arith.constant 0.000000e+00 : f32
    %24 = vector.broadcast %cst_13 : f32 to vector<8x16xf32>
    %25 = arith.maximumf %23, %24 : vector<8x16xf32>
    %26 = arith.truncf %25 : vector<8x16xf32> to vector<8x16xbf16>
    %cst_14 = arith.constant dense<0.000000e+00> : vector<8x16xf32>
    %27 = tpu.matmul %26, %2, %cst_14 {dimension_numbers = #tpu.dot_dimension_numbers<[1], [0], [0], [1], [0, 0, 1, 1], [], []>} : vector<8x16xbf16>, vector<16x16xbf16>, vector<8x16xf32> -> vector<8x16xf32>
    %28 = vector.broadcast %10 : vector<1x16xf32> to vector<8x16xf32>
    %29 = arith.addf %27, %28 : vector<8x16xf32>
    %cst_15 = arith.constant 0.000000e+00 : f32
    %30 = vector.broadcast %cst_15 : f32 to vector<8x16xf32>
    %31 = arith.maximumf %29, %30 : vector<8x16xf32>
    %32 = arith.truncf %31 : vector<8x16xf32> to vector<8x16xbf16>
    %cst_16 = arith.constant dense<0.000000e+00> : vector<8x16xf32>
    %33 = tpu.matmul %32, %3, %cst_16 {dimension_numbers = #tpu.dot_dimension_numbers<[1], [0], [0], [1], [0, 0, 1, 1], [], []>} : vector<8x16xbf16>, vector<16x16xbf16>, vector<8x16xf32> -> vector<8x16xf32>
    %34 = arith.addf %23, %33 : vector<8x16xf32>
    %35 = vector.broadcast %11 : vector<1x16xf32> to vector<8x16xf32>
    %36 = arith.addf %34, %35 : vector<8x16xf32>
    %cst_17 = arith.constant 0.000000e+00 : f32
    %37 = vector.broadcast %cst_17 : f32 to vector<8x16xf32>
    %38 = arith.maximumf %36, %37 : vector<8x16xf32>
    %39 = arith.truncf %38 : vector<8x16xf32> to vector<8x16xbf16>
    %cst_18 = arith.constant dense<0.000000e+00> : vector<8x16xf32>
    %40 = tpu.matmul %39, %4, %cst_18 {dimension_numbers = #tpu.dot_dimension_numbers<[1], [0], [0], [1], [0, 0, 1, 1], [], []>} : vector<8x16xbf16>, vector<16x16xbf16>, vector<8x16xf32> -> vector<8x16xf32>
    %41 = vector.broadcast %12 : vector<1x16xf32> to vector<8x16xf32>
    %42 = arith.addf %40, %41 : vector<8x16xf32>
    %cst_19 = arith.constant 0.000000e+00 : f32
    %43 = vector.broadcast %cst_19 : f32 to vector<8x16xf32>
    %44 = arith.maximumf %42, %43 : vector<8x16xf32>
    %45 = arith.truncf %44 : vector<8x16xf32> to vector<8x16xbf16>
    %cst_20 = arith.constant dense<0.000000e+00> : vector<8x16xf32>
    %46 = tpu.matmul %45, %5, %cst_20 {dimension_numbers = #tpu.dot_dimension_numbers<[1], [0], [0], [1], [0, 0, 1, 1], [], []>} : vector<8x16xbf16>, vector<16x16xbf16>, vector<8x16xf32> -> vector<8x16xf32>
    %47 = arith.addf %36, %46 : vector<8x16xf32>
    %48 = vector.broadcast %13 : vector<1x16xf32> to vector<8x16xf32>
    %49 = arith.addf %47, %48 : vector<8x16xf32>
    %cst_21 = arith.constant 0.000000e+00 : f32
    %50 = vector.broadcast %cst_21 : f32 to vector<8x16xf32>
    %51 = arith.maximumf %49, %50 : vector<8x16xf32>
    %52 = arith.truncf %51 : vector<8x16xf32> to vector<8x16xbf16>
    %cst_22 = arith.constant dense<0.000000e+00> : vector<8x16xf32>
    %53 = tpu.matmul %52, %6, %cst_22 {dimension_numbers = #tpu.dot_dimension_numbers<[1], [0], [0], [1], [0, 0, 1, 1], [], []>} : vector<8x16xbf16>, vector<16x16xbf16>, vector<8x16xf32> -> vector<8x16xf32>
    %54 = vector.broadcast %14 : vector<1x16xf32> to vector<8x16xf32>
    %55 = arith.addf %53, %54 : vector<8x16xf32>
    %56 = vector.extract_strided_slice %55 {offsets = [0, 0], sizes = [8, 14], strides = [1, 1]} : vector<8x16xf32> to vector<8x14xf32>
    %c0_23 = arith.constant 0 : index
    %c0_24 = arith.constant 0 : index
    %57 = vector.load %arg4[%c0_23, %c0_24] : memref<8x14xf32, #tpu.memory_space<vmem>>, vector<8x14xf32>
    tpu.vector_store %arg4[%c0_23, %c0_24], %56 {strides = array<i32>} : memref<8x14xf32, #tpu.memory_space<vmem>>, vector<8x14xf32>,
    return
  }
  func.func @transform_0(%arg0: i32) -> (i32, i32) {
    %c0_i32 = arith.constant 0 : i32
    %c0_i32_0 = arith.constant 0 : i32
    return %arg0, %c0_i32 : i32, i32
  }
  func.func @transform_1(%arg0: i32) -> (i32, i32) {
    %c0_i32 = arith.constant 0 : i32
    %c0_i32_0 = arith.constant 0 : i32
    return %arg0, %c0_i32 : i32, i32
  }
  func.func @transform_2(%arg0: i32) -> (i32, i32) {
    %c0_i32 = arith.constant 0 : i32
    %c0_i32_0 = arith.constant 0 : i32
    %c0_i32_1 = arith.constant 0 : i32
    return %c0_i32, %c0_i32_0 : i32, i32
  }
  func.func @transform_3(%arg0: i32) -> (i32, i32) {
    %c0_i32 = arith.constant 0 : i32
    %c0_i32_0 = arith.constant 0 : i32
    return %arg0, %c0_i32 : i32, i32
  }
}

</mosaic_0001>

<llo_original>
// kernel: angle_resnet_forward.1
$region0: #{angle_resnet_forward.1}
  #allocation0 [shape = 'u32[]', space=smem, size = 0x4, offset = 0x4, fixed_abs, tag = 'smem constant byte address 0x4 - core index']
  #allocation1 [shape = 'u32[144,128]{1,0:T(1,128)}', space=vmem, size = 0x12000, scoped, tag = 'internal scratch']
  %s0 = inlined_call_operand.hbm [shape: f32[8,32], index: 0, kind: input, shape index: {}]
  %s1 = inlined_call_operand.hbm [shape: f32[8,32], index: 1, kind: input, shape index: {}]
  %s2 = inlined_call_operand.hbm [shape: bf16[160,16], index: 2, kind: input, shape index: {}]
  %s3 = inlined_call_operand.vmem [shape: f32[8,14], index: 3, kind: output, shape index: {}]
  %s4 = sld [smem:[#allocation0]]
  $region34: #{angle_resnet_forward.1} parent=0
    _
  %s6 = ssub.s32 1, %s4
  %s7 = scalar_select 0, %s6, %s4
  $region1: #{angle_resnet_forward.1} parent=0
    #allocation2 [shape = 'u8[4096]{0}', space=vmem, size = 0x1000, scoped, tag = 'input window, operand 0, single buffered']
    #allocation3 [shape = 's32[1]{0}', space=sflag, size = 0x4, scoped, tag = 'scoped memory for angle_resnet_forward.1']
    #allocation4 [shape = 'u8[4096]{0}', space=vmem, size = 0x1000, scoped, tag = 'input window, operand 1, single buffered']
    #allocation5 [shape = 's32[1]{0}', space=sflag, size = 0x4, scoped, tag = 'scoped memory for angle_resnet_forward.1']
    #allocation6 [shape = 'u8[40960]{0}', space=vmem, size = 0xa000, scoped, tag = 'input window, operand 2, single buffered']
    %8 = vsyncpa [#allocation3], 0
    %9 = vsyncpa [#allocation5], 0
    // Predicated region
    $region2: #{angle_resnet_forward.1} parent=1 // pred_check
      _
    $region3: #{angle_resnet_forward.1} parent=1 // pred_check_branch
      %11 = sbr.rel (0) target = $region5
    $region4: #{angle_resnet_forward.1} parent=1 // pred_region
      %s13 = ssub.s32 128, 128
      %14 = vsyncadd [#allocation3], %s13
      %s16 = sshll.u32 [#allocation2], 4
      %s17 = int_to_ptr.vmem [resolvable:$true] %s16
      %19 = dma.hbm_to_vmem [thread:$0]  %s0, 128, %s17, [#allocation3]
    $region5: #{angle_resnet_forward.1} parent=1 // pred_fallthru
      _
    // Predicated region
    $region6: #{angle_resnet_forward.1} parent=1 // pred_check
      _
    $region7: #{angle_resnet_forward.1} parent=1 // pred_check_branch
      %21 = sbr.rel (0) target = $region9
    $region8: #{angle_resnet_forward.1} parent=1 // pred_region
      %s23 = ssub.s32 128, 128
      %24 = vsyncadd [#allocation5], %s23
      %s26 = sshll.u32 [#allocation4], 4
      %s27 = int_to_ptr.vmem [resolvable:$true] %s26
      %29 = dma.hbm_to_vmem [thread:$0]  %s1, 128, %s27, [#allocation5]
    $region9: #{angle_resnet_forward.1} parent=1 // pred_fallthru
      _
    // Predicated region
    $region10: #{angle_resnet_forward.1} parent=1 // pred_check
      _
    $region11: #{angle_resnet_forward.1} parent=1 // pred_check_branch
      %31 = sbr.rel (0) target = $region13
    $region12: #{angle_resnet_forward.1} parent=1 // pred_region
      %s33 = ssub.s32 1280, 1280
      %34 = vsyncadd [#allocation5], %s33
      %s35 = sshll.u32 [#allocation6], 4
      %s36 = int_to_ptr.vmem [resolvable:$true] %s35
      %41 = dma.hbm_to_vmem [thread:$0]  %s2, 1280, %s36, [#allocation5], 64, 64, 4
    $region13: #{angle_resnet_forward.1} parent=1 // pred_fallthru
      _
    // Predicated region
    $region14: #{angle_resnet_forward.1} parent=1 // pred_check
      _
    $region15: #{angle_resnet_forward.1} parent=1 // pred_check_branch
      %43 = sbr.rel (0) target = $region17
    $region16: #{angle_resnet_forward.1} parent=1 // pred_region
      %44 = dma.done [#allocation3], 128
    $region17: #{angle_resnet_forward.1} parent=1 // pred_fallthru
      _
    // Predicated region
    $region18: #{angle_resnet_forward.1} parent=1 // pred_check
      _
    $region19: #{angle_resnet_forward.1} parent=1 // pred_check_branch
      %46 = sbr.rel (0) target = $region21
    $region20: #{angle_resnet_forward.1} parent=1 // pred_region
      %47 = dma.done [#allocation5], 128
    $region21: #{angle_resnet_forward.1} parent=1 // pred_fallthru
      _
    // Predicated region
    $region22: #{angle_resnet_forward.1} parent=1 // pred_check
      _
    $region23: #{angle_resnet_forward.1} parent=1 // pred_check_branch
      %49 = sbr.rel (0) target = $region25
    $region24: #{angle_resnet_forward.1} parent=1 // pred_region
      %50 = dma.done [#allocation5], 1280
    $region25: #{angle_resnet_forward.1} parent=1 // pred_fallthru
      _
    %v52 = vld [vmem:[#allocation6] sm:$0xf]
    %v53 = vld [vmem:[#allocation6 + $0x4] sm:$0xf]
    %v54 = vld [vmem:[#allocation6 + $0x8] sm:$0xf]
    %v55 = vld [vmem:[#allocation6 + $0xc] sm:$0xf]
    %v56 = vld [vmem:[#allocation6 + $0x10] sm:$0xf]
    %v57 = vld [vmem:[#allocation6 + $0x14] sm:$0xf]
    %v58 = vld [vmem:[#allocation6 + $0x18] sm:$0xf]
    %v59 = vld [vmem:[#allocation6 + $0x1c] sm:$0xf]
    %v60 = vld [vmem:[#allocation6 + $0x20] sm:$0xf]
    %v61 = vld [vmem:[#allocation6 + $0x24] sm:$0xf]
    %v62 = vld [vmem:[#allocation6 + $0x28] sm:$0xf]
    %v63 = vld [vmem:[#allocation6 + $0x2c] sm:$0xf]
    %v64 = vld [vmem:[#allocation6 + $0x30] sm:$0xf]
    %v65 = vld [vmem:[#allocation6 + $0x34] sm:$0xf]
    %v66 = vld [vmem:[#allocation6 + $0x38] sm:$0xf]
    %v67 = vld [vmem:[#allocation6 + $0x3c] sm:$0xf]
    %v68 = vld [vmem:[#allocation6 + $0x40] sm:$0xf]
    %v69 = vld [vmem:[#allocation6 + $0x44] sm:$0xf]
    %v70 = vld [vmem:[#allocation6 + $0x48] sm:$0x7]
    %v71 = vunpack.c.l.bf16 %v70
    %v72 = vld [vmem:[#allocation2] sm:$0xff]
    %v73 = vpack.c.bf16 %v72, %v72
    %v74 = vld [vmem:[#allocation4] sm:$0xff]
    %v75 = vpack.c.bf16 %v74, %v74
    %v80 = vunpack.c.l.b16 %v56
    %v81 = vunpack.c.l.b16 %v57
    %v82 = vunpack.c.l.b16 %v58
    %v83 = vunpack.c.l.b16 %v59
    %v84 = vpack.c.b16 %v81, %v80
    %v85 = vpack.c.b16 %v83, %v82
    %vm88 = vcmask 261120
    %v90 = vsel %vm88, %v75, 0
    %92 = vmatprep.subr.bf16.mxu0 0
    %93 = vmatpush1.bf16.msra.mxu0 0
    %94 = vmatprep.subr.bf16.mxu0 0
    %95 = vmatpush1.bf16.msra.mxu0 0
    %96 = vmatprep.subr.bf16.mxu0 0
    %97 = vmatpush1.bf16.msra.mxu0 0
    %98 = vmatprep.subr.bf16.mxu0 0
    %99 = vmatpush1.bf16.msra.mxu0 0
    %100 = vmatprep.subr.bf16.mxu0 0
    %101 = vmatpush1.bf16.msra.mxu0 0
    %102 = vmatprep.subr.bf16.mxu0 0
    %103 = vmatpush1.bf16.msra.mxu0 0
    %104 = vmatprep.subr.bf16.mxu0 0
    %105 = vmatpush1.bf16.msra.mxu0 %v85
    %106 = vmatprep.subr.bf16.mxu0 0
    %107 = vmatpush1.bf16.msra.mxu0 %v84
    %108 = vmatprep.subr.bf16.mxu0 0
    %109 = vmatpush2.bf16.msra.mxu0 0
    %110 = vmatprep.subr.bf16.mxu0 0
    %111 = vmatpush2.bf16.msra.mxu0 0
    %112 = vmatprep.subr.bf16.mxu0 0
    %113 = vmatpush2.bf16.msra.mxu0 0
    %114 = vmatprep.subr.bf16.mxu0 0
    %115 = vmatpush2.bf16.msra.mxu0 0
    %116 = vmatprep.subr.bf16.mxu0 0
    %117 = vmatpush2.bf16.msra.mxu0 0
    %118 = vmatprep.subr.bf16.mxu0 0
    %119 = vmatpush2.bf16.msra.mxu0 0
    %120 = vmatprep.subr.bf16.mxu0 0
    %121 = vmatpush2.bf16.msra.mxu0 0
    %122 = vmatprep.subr.bf16.mxu0 0
    %123 = vmatpush2.bf16.msra.mxu0 0
    %124 = vmatprep.mubr.bf16.mxu0 0
    %125 = vmatmul.mubr.bf16.gmra.mxu0 %v90
    %v126 = vpop.f32.mrf.mxu0
    %v127 = vadd.f32 0.0, %v126
    %v128 = vpop.f32.mrf.mxu0
    %v129 = vpop.f32.mrf.mxu0
    %v130 = vpop.f32.mrf.mxu0
    %131 = vdwg.mxu0
    %v136 = vunpack.c.l.b16 %v52
    %v137 = vunpack.c.l.b16 %v53
    %v138 = vunpack.c.l.b16 %v54
    %v139 = vunpack.c.l.b16 %v55
    %v140 = vpack.c.b16 %v137, %v136
    %v141 = vpack.c.b16 %v139, %v138
    %v145 = vsel %vm88, %v73, 0
    %147 = vmatprep.subr.bf16.mxu0 0
    %148 = vmatpush1.bf16.msra.mxu0 0
    %149 = vmatprep.subr.bf16.mxu0 0
    %150 = vmatpush1.bf16.msra.mxu0 0
    %151 = vmatprep.subr.bf16.mxu0 0
    %152 = vmatpush1.bf16.msra.mxu0 0
    %153 = vmatprep.subr.bf16.mxu0 0
    %154 = vmatpush1.bf16.msra.mxu0 0
    %155 = vmatprep.subr.bf16.mxu0 0
    %156 = vmatpush1.bf16.msra.mxu0 0
    %157 = vmatprep.subr.bf16.mxu0 0
    %158 = vmatpush1.bf16.msra.mxu0 0
    %159 = vmatprep.subr.bf16.mxu0 0
    %160 = vmatpush1.bf16.msra.mxu0 %v141
    %161 = vmatprep.subr.bf16.mxu0 0
    %162 = vmatpush1.bf16.msra.mxu0 %v140
    %163 = vmatprep.subr.bf16.mxu0 0
    %164 = vmatpush2.bf16.msra.mxu0 0
    %165 = vmatprep.subr.bf16.mxu0 0
    %166 = vmatpush2.bf16.msra.mxu0 0
    %167 = vmatprep.subr.bf16.mxu0 0
    %168 = vmatpush2.bf16.msra.mxu0 0
    %169 = vmatprep.subr.bf16.mxu0 0
    %170 = vmatpush2.bf16.msra.mxu0 0
    %171 = vmatprep.subr.bf16.mxu0 0
    %172 = vmatpush2.bf16.msra.mxu0 0
    %173 = vmatprep.subr.bf16.mxu0 0
    %174 = vmatpush2.bf16.msra.mxu0 0
    %175 = vmatprep.subr.bf16.mxu0 0
    %176 = vmatpush2.bf16.msra.mxu0 0
    %177 = vmatprep.subr.bf16.mxu0 0
    %178 = vmatpush2.bf16.msra.mxu0 0
    %179 = vmatprep.mubr.bf16.mxu0 0
    %180 = vmatmul.mubr.bf16.gmra.mxu0 %v145
    %v181 = vpop.f32.mrf.mxu0
    %v182 = vadd.f32 %v127, %v181
    %v183 = vpop.f32.mrf.mxu0
    %v184 = vpop.f32.mrf.mxu0
    %v185 = vpop.f32.mrf.mxu0
    %186 = vdwg.mxu0
    %v187 = vlaneseq
    %v188 = vshrl.u32 %v187, 7
    %v189 = vsub.s32 0, %v188
    %v190 = vrot.slane %v71, %v189
    %v191 = vadd.f32 %v182, %v190
    %v192 = vmax.f32 %v191, 0.0
    %v193 = vpack.c.bf16 %v192, %v192
    %v194 = vlaneseq
    %v195 = vshrl.u32 %v194, 7
    %v196 = vsub.s32 1, %v195
    %v197 = vrot.slane %v71, %v196
    %v200 = vunpack.c.l.b16 %v60
    %v201 = vunpack.c.l.b16 %v61
    %v202 = vpack.c.b16 %v201, %v200
    %vm204 = vcmask 130048
    %v206 = vsel %vm204, %v193, 0
    %208 = vmatprep.subr.bf16.mxu0 0
    %209 = vmatpush1.bf16.msra.mxu0 0
    %210 = vmatprep.subr.bf16.mxu0 0
    %211 = vmatpush1.bf16.msra.mxu0 0
    %212 = vmatprep.subr.bf16.mxu0 0
    %213 = vmatpush1.bf16.msra.mxu0 0
    %214 = vmatprep.subr.bf16.mxu0 0
    %215 = vmatpush1.bf16.msra.mxu0 0
    %216 = vmatprep.subr.bf16.mxu0 0
    %217 = vmatpush1.bf16.msra.mxu0 0
    %218 = vmatprep.subr.bf16.mxu0 0
    %219 = vmatpush1.bf16.msra.mxu0 0
    %220 = vmatprep.subr.bf16.mxu0 0
    %221 = vmatpush1.bf16.msra.mxu0 0
    %222 = vmatprep.subr.bf16.mxu0 0
    %223 = vmatpush1.bf16.msra.mxu0 %v202
    %224 = vmatprep.subr.bf16.mxu0 0
    %225 = vmatpush2.bf16.msra.mxu0 0
    %226 = vmatprep.subr.bf16.mxu0 0
    %227 = vmatpush2.bf16.msra.mxu0 0
    %228 = vmatprep.subr.bf16.mxu0 0
    %229 = vmatpush2.bf16.msra.mxu0 0
    %230 = vmatprep.subr.bf16.mxu0 0
    %231 = vmatpush2.bf16.msra.mxu0 0
    %232 = vmatprep.subr.bf16.mxu0 0
    %233 = vmatpush2.bf16.msra.mxu0 0
    %234 = vmatprep.subr.bf16.mxu0 0
    %235 = vmatpush2.bf16.msra.mxu0 0
    %236 = vmatprep.subr.bf16.mxu0 0
    %237 = vmatpush2.bf16.msra.mxu0 0
    %238 = vmatprep.subr.bf16.mxu0 0
    %239 = vmatpush2.bf16.msra.mxu0 0
    %240 = vmatprep.mubr.bf16.mxu0 0
    %241 = vmatmul.mubr.bf16.gmra.mxu0 %v206
    %v242 = vpop.f32.mrf.mxu0
    %v243 = vadd.f32 %v197, %v242
    %v244 = vpop.f32.mrf.mxu0
    %v245 = vpop.f32.mrf.mxu0
    %v246 = vpop.f32.mrf.mxu0
    %247 = vdwg.mxu0
    %v248 = vmax.f32 %v243, 0.0
    %v249 = vpack.c.bf16 %v248, %v248
    %v252 = vunpack.c.l.b16 %v62
    %v253 = vunpack.c.l.b16 %v63
    %v254 = vpack.c.b16 %v253, %v252
    %v257 = vsel %vm204, %v249, 0
    %259 = vmatprep.subr.bf16.mxu0 0
    %260 = vmatpush1.bf16.msra.mxu0 0
    %261 = vmatprep.subr.bf16.mxu0 0
    %262 = vmatpush1.bf16.msra.mxu0 0
    %263 = vmatprep.subr.bf16.mxu0 0
    %264 = vmatpush1.bf16.msra.mxu0 0
    %265 = vmatprep.subr.bf16.mxu0 0
    %266 = vmatpush1.bf16.msra.mxu0 0
    %267 = vmatprep.subr.bf16.mxu0 0
    %268 = vmatpush1.bf16.msra.mxu0 0
    %269 = vmatprep.subr.bf16.mxu0 0
    %270 = vmatpush1.bf16.msra.mxu0 0
    %271 = vmatprep.subr.bf16.mxu0 0
    %272 = vmatpush1.bf16.msra.mxu0 0
    %273 = vmatprep.subr.bf16.mxu0 0
    %274 = vmatpush1.bf16.msra.mxu0 %v254
    %275 = vmatprep.subr.bf16.mxu0 0
    %276 = vmatpush2.bf16.msra.mxu0 0
    %277 = vmatprep.subr.bf16.mxu0 0
    %278 = vmatpush2.bf16.msra.mxu0 0
    %279 = vmatprep.subr.bf16.mxu0 0
    %280 = vmatpush2.bf16.msra.mxu0 0
    %281 = vmatprep.subr.bf16.mxu0 0
    %282 = vmatpush2.bf16.msra.mxu0 0
    %283 = vmatprep.subr.bf16.mxu0 0
    %284 = vmatpush2.bf16.msra.mxu0 0
    %285 = vmatprep.subr.bf16.mxu0 0
    %286 = vmatpush2.bf16.msra.mxu0 0
    %287 = vmatprep.subr.bf16.mxu0 0
    %288 = vmatpush2.bf16.msra.mxu0 0
    %289 = vmatprep.subr.bf16.mxu0 0
    %290 = vmatpush2.bf16.msra.mxu0 0
    %291 = vmatprep.mubr.bf16.mxu0 0
    %292 = vmatmul.mubr.bf16.gmra.mxu0 %v257
    %v293 = vpop.f32.mrf.mxu0
    %v294 = vadd.f32 0.0, %v293
    %v295 = vpop.f32.mrf.mxu0
    %v296 = vpop.f32.mrf.mxu0
    %v297 = vpop.f32.mrf.mxu0
    %298 = vdwg.mxu0
    %v299 = vadd.f32 %v191, %v294
    %v300 = vlaneseq
    %v301 = vshrl.u32 %v300, 7
    %v302 = vsub.s32 2, %v301
    %v303 = vrot.slane %v71, %v302
    %v304 = vadd.f32 %v299, %v303
    %v305 = vmax.f32 %v304, 0.0
    %v306 = vpack.c.bf16 %v305, %v305
    %v307 = vlaneseq
    %v308 = vshrl.u32 %v307, 7
    %v309 = vsub.s32 3, %v308
    %v310 = vrot.slane %v71, %v309
    %v313 = vunpack.c.l.b16 %v64
    %v314 = vunpack.c.l.b16 %v65
    %v315 = vpack.c.b16 %v314, %v313
    %v318 = vsel %vm204, %v306, 0
    %320 = vmatprep.subr.bf16.mxu0 0
    %321 = vmatpush1.bf16.msra.mxu0 0
    %322 = vmatprep.subr.bf16.mxu0 0
    %323 = vmatpush1.bf16.msra.mxu0 0
    %324 = vmatprep.subr.bf16.mxu0 0
    %325 = vmatpush1.bf16.msra.mxu0 0
    %326 = vmatprep.subr.bf16.mxu0 0
    %327 = vmatpush1.bf16.msra.mxu0 0
    %328 = vmatprep.subr.bf16.mxu0 0
    %329 = vmatpush1.bf16.msra.mxu0 0
    %330 = vmatprep.subr.bf16.mxu0 0
    %331 = vmatpush1.bf16.msra.mxu0 0
    %332 = vmatprep.subr.bf16.mxu0 0
    %333 = vmatpush1.bf16.msra.mxu0 0
    %334 = vmatprep.subr.bf16.mxu0 0
    %335 = vmatpush1.bf16.msra.mxu0 %v315
    %336 = vmatprep.subr.bf16.mxu0 0
    %337 = vmatpush2.bf16.msra.mxu0 0
    %338 = vmatprep.subr.bf16.mxu0 0
    %339 = vmatpush2.bf16.msra.mxu0 0
    %340 = vmatprep.subr.bf16.mxu0 0
    %341 = vmatpush2.bf16.msra.mxu0 0
    %342 = vmatprep.subr.bf16.mxu0 0
    %343 = vmatpush2.bf16.msra.mxu0 0
    %344 = vmatprep.subr.bf16.mxu0 0
    %345 = vmatpush2.bf16.msra.mxu0 0
    %346 = vmatprep.subr.bf16.mxu0 0
    %347 = vmatpush2.bf16.msra.mxu0 0
    %348 = vmatprep.subr.bf16.mxu0 0
    %349 = vmatpush2.bf16.msra.mxu0 0
    %350 = vmatprep.subr.bf16.mxu0 0
    %351 = vmatpush2.bf16.msra.mxu0 0
    %352 = vmatprep.mubr.bf16.mxu0 0
    %353 = vmatmul.mubr.bf16.gmra.mxu0 %v318
    %v354 = vpop.f32.mrf.mxu0
    %v355 = vadd.f32 %v310, %v354
    %v356 = vpop.f32.mrf.mxu0
    %v357 = vpop.f32.mrf.mxu0
    %v358 = vpop.f32.mrf.mxu0
    %359 = vdwg.mxu0
    %v360 = vmax.f32 %v355, 0.0
    %v361 = vpack.c.bf16 %v360, %v360
    %v364 = vunpack.c.l.b16 %v66
    %v365 = vunpack.c.l.b16 %v67
    %v366 = vpack.c.b16 %v365, %v364
    %v369 = vsel %vm204, %v361, 0
    %371 = vmatprep.subr.bf16.mxu0 0
    %372 = vmatpush1.bf16.msra.mxu0 0
    %373 = vmatprep.subr.bf16.mxu0 0
    %374 = vmatpush1.bf16.msra.mxu0 0
    %375 = vmatprep.subr.bf16.mxu0 0
    %376 = vmatpush1.bf16.msra.mxu0 0
    %377 = vmatprep.subr.bf16.mxu0 0
    %378 = vmatpush1.bf16.msra.mxu0 0
    %379 = vmatprep.subr.bf16.mxu0 0
    %380 = vmatpush1.bf16.msra.mxu0 0
    %381 = vmatprep.subr.bf16.mxu0 0
    %382 = vmatpush1.bf16.msra.mxu0 0
    %383 = vmatprep.subr.bf16.mxu0 0
    %384 = vmatpush1.bf16.msra.mxu0 0
    %385 = vmatprep.subr.bf16.mxu0 0
    %386 = vmatpush1.bf16.msra.mxu0 %v366
    %387 = vmatprep.subr.bf16.mxu0 0
    %388 = vmatpush2.bf16.msra.mxu0 0
    %389 = vmatprep.subr.bf16.mxu0 0
    %390 = vmatpush2.bf16.msra.mxu0 0
    %391 = vmatprep.subr.bf16.mxu0 0
    %392 = vmatpush2.bf16.msra.mxu0 0
    %393 = vmatprep.subr.bf16.mxu0 0
    %394 = vmatpush2.bf16.msra.mxu0 0
    %395 = vmatprep.subr.bf16.mxu0 0
    %396 = vmatpush2.bf16.msra.mxu0 0
    %397 = vmatprep.subr.bf16.mxu0 0
    %398 = vmatpush2.bf16.msra.mxu0 0
    %399 = vmatprep.subr.bf16.mxu0 0
    %400 = vmatpush2.bf16.msra.mxu0 0
    %401 = vmatprep.subr.bf16.mxu0 0
    %402 = vmatpush2.bf16.msra.mxu0 0
    %403 = vmatprep.mubr.bf16.mxu0 0
    %404 = vmatmul.mubr.bf16.gmra.mxu0 %v369
    %v405 = vpop.f32.mrf.mxu0
    %v406 = vadd.f32 0.0, %v405
    %v407 = vpop.f32.mrf.mxu0
    %v408 = vpop.f32.mrf.mxu0
    %v409 = vpop.f32.mrf.mxu0
    %410 = vdwg.mxu0
    %v411 = vadd.f32 %v304, %v406
    %v412 = vlaneseq
    %v413 = vshrl.u32 %v412, 7
    %v414 = vsub.s32 4, %v413
    %v415 = vrot.slane %v71, %v414
    %v416 = vadd.f32 %v411, %v415
    %v417 = vmax.f32 %v416, 0.0
    %v418 = vpack.c.bf16 %v417, %v417
    %v419 = vlaneseq
    %v420 = vshrl.u32 %v419, 7
    %v421 = vsub.s32 5, %v420
    %v422 = vrot.slane %v71, %v421
    %v425 = vunpack.c.l.b16 %v68
    %v426 = vunpack.c.l.b16 %v69
    %v427 = vpack.c.b16 %v426, %v425
    %v430 = vsel %vm204, %v418, 0
    %432 = vmatprep.subr.bf16.mxu0 0
    %433 = vmatpush1.bf16.msra.mxu0 0
    %434 = vmatprep.subr.bf16.mxu0 0
    %435 = vmatpush1.bf16.msra.mxu0 0
    %436 = vmatprep.subr.bf16.mxu0 0
    %437 = vmatpush1.bf16.msra.mxu0 0
    %438 = vmatprep.subr.bf16.mxu0 0
    %439 = vmatpush1.bf16.msra.mxu0 0
    %440 = vmatprep.subr.bf16.mxu0 0
    %441 = vmatpush1.bf16.msra.mxu0 0
    %442 = vmatprep.subr.bf16.mxu0 0
    %443 = vmatpush1.bf16.msra.mxu0 0
    %444 = vmatprep.subr.bf16.mxu0 0
    %445 = vmatpush1.bf16.msra.mxu0 0
    %446 = vmatprep.subr.bf16.mxu0 0
    %447 = vmatpush1.bf16.msra.mxu0 %v427
    %448 = vmatprep.subr.bf16.mxu0 0
    %449 = vmatpush2.bf16.msra.mxu0 0
    %450 = vmatprep.subr.bf16.mxu0 0
    %451 = vmatpush2.bf16.msra.mxu0 0
    %452 = vmatprep.subr.bf16.mxu0 0
    %453 = vmatpush2.bf16.msra.mxu0 0
    %454 = vmatprep.subr.bf16.mxu0 0
    %455 = vmatpush2.bf16.msra.mxu0 0
    %456 = vmatprep.subr.bf16.mxu0 0
    %457 = vmatpush2.bf16.msra.mxu0 0
    %458 = vmatprep.subr.bf16.mxu0 0
    %459 = vmatpush2.bf16.msra.mxu0 0
    %460 = vmatprep.subr.bf16.mxu0 0
    %461 = vmatpush2.bf16.msra.mxu0 0
    %462 = vmatprep.subr.bf16.mxu0 0
    %463 = vmatpush2.bf16.msra.mxu0 0
    %464 = vmatprep.mubr.bf16.mxu0 0
    %465 = vmatmul.mubr.bf16.gmra.mxu0 %v430
    %v466 = vpop.f32.mrf.mxu0
    %v467 = vadd.f32 %v422, %v466
    %v468 = vpop.f32.mrf.mxu0
    %v469 = vpop.f32.mrf.mxu0
    %v470 = vpop.f32.mrf.mxu0
    %471 = vdwg.mxu0
    %vm472 = vcmask 113664
    %473 = vst.msk [vmem:[%s3] sm:$0xff] %vm472, %v467
    // Predicated region
    $region26: #{angle_resnet_forward.1} parent=1 // pred_check
      _
    $region27: #{angle_resnet_forward.1} parent=1 // pred_check_branch
      %475 = sbr.rel (0) target = $region29
    $region28: #{angle_resnet_forward.1} parent=1 // pred_region
      _
    $region29: #{angle_resnet_forward.1} parent=1 // pred_fallthru
      _
    // Predicated region
    $region30: #{angle_resnet_forward.1} parent=1 // pred_check
      _
    $region31: #{angle_resnet_forward.1} parent=1 // pred_check_branch
      %477 = sbr.rel (0) target = $region33
    $region32: #{angle_resnet_forward.1} parent=1 // pred_region
      _
    $region33: #{angle_resnet_forward.1} parent=1 // pred_fallthru
      _
    %478 = vsyncpa [#allocation3], 1
    %479 = vsyncpa [#allocation5], 1

</llo_original>
